<compile_context>
chip_gen: v5e
topology: v5e:2x2
jax: 0.10.0
libtpu: 0.0.40
codegen_flags: <defaults>
</compile_context>

<pallas_src>
import functools

import jax
import jax.numpy as jnp
from jax.experimental import pallas as pl
from jax.experimental.pallas import tpu as pltpu


def _head_kernel(xq_ref, xkv_ref, wq_ref, wk_ref, wv_ref, out_ref, attn_ref,
                 *, scale, causal):
    """Blocks: xq (1, tq, C) query rows; xkv (1, T, C) full sequence for k/v."""
    xq = xq_ref[0]          # (tq, C)
    xkv = xkv_ref[0]        # (T,  C)

    # Projections (no bias, matching nn.Linear(..., bias=False)).
    q = jnp.dot(xq, wq_ref[...], preferred_element_type=jnp.float32)    # (tq, hs)
    k = jnp.dot(xkv, wk_ref[...], preferred_element_type=jnp.float32)   # (T,  hs)
    v = jnp.dot(xkv, wv_ref[...], preferred_element_type=jnp.float32)   # (T,  hs)

    # Scaled attention scores: q @ k^T  (contract the head dim of both).
    s = jax.lax.dot_general(q, k, (((1,), (1,)), ((), ())),
                            preferred_element_type=jnp.float32) * scale  # (tq, T)

    if causal:
        tq = s.shape[0]
        q_start = pl.program_id(1) * tq
        row = q_start + jax.lax.broadcasted_iota(jnp.int32, s.shape, 0)
        col = jax.lax.broadcasted_iota(jnp.int32, s.shape, 1)
        s = jnp.where(col <= row, s, -jnp.inf)

    # Numerically stable softmax along the key axis.
    m = jnp.max(s, axis=-1, keepdims=True)
    p = jnp.exp(s - m)
    l = jnp.sum(p, axis=-1, keepdims=True)
    w = p / l                                                            # (tq, T)

    out = jnp.dot(w, v, preferred_element_type=jnp.float32)             # (tq, hs)

    out_ref[0] = out.astype(out_ref.dtype)
    attn_ref[0] = w.astype(attn_ref.dtype)


def _pick_q_tile(T):
    """Largest query tile <= 256 that divides T (tq=T for small sequences)."""
    if T <= 256:
        return T
    for cand in (256, 128, 64, 32, 16, 8):
        if T % cand == 0:
            return cand
    return T


@functools.partial(jax.jit, static_argnames=("is_decoder",))
def head_forward(x, wq, wk, wv, *, is_decoder=True):
    """x: (B, T, C); wq/wk/wv: (C, head_size) (transposed vs. nn.Linear.weight).

    Returns (out, weights) with out: (B, T, head_size), weights: (B, T, T).
    """
    B, T, C = x.shape
    hs = wq.shape[1]
    tq = _pick_q_tile(T)
    n_q = T // tq

    kernel = functools.partial(
        _head_kernel, scale=float(hs) ** -0.5, causal=is_decoder)

    out, attn = pl.pallas_call(
        kernel,
        out_shape=(jax.ShapeDtypeStruct((B, T, hs), x.dtype),
                   jax.ShapeDtypeStruct((B, T, T), x.dtype)),
        grid_spec=pltpu.PrefetchScalarGridSpec(
            num_scalar_prefetch=0,
            grid=(B, n_q),
            in_specs=[
                pl.BlockSpec((1, tq, C), lambda b, qi: (b, qi, 0)),  # query rows
                pl.BlockSpec((1, T, C), lambda b, qi: (b, 0, 0)),    # full seq for k/v
                pl.BlockSpec((C, hs), lambda b, qi: (0, 0)),         # Wq (resident)
                pl.BlockSpec((C, hs), lambda b, qi: (0, 0)),         # Wk (resident)
                pl.BlockSpec((C, hs), lambda b, qi: (0, 0)),         # Wv (resident)
            ],
            out_specs=[
                pl.BlockSpec((1, tq, hs), lambda b, qi: (b, qi, 0)),  # out
                pl.BlockSpec((1, tq, T), lambda b, qi: (b, qi, 0)),   # attention weights
            ],
        ),
        compiler_params=pltpu.CompilerParams(
            dimension_semantics=("parallel", "parallel"),
            vmem_limit_bytes=64 * 1024 * 1024),
    )(x, x, wq, wk, wv)

    return out, attn


def init_head_params(key, n_embd, head_size, dtype=jnp.float32):
    """nn.Linear(bias=False) init: U(-1/sqrt(fan_in), 1/sqrt(fan_in))."""
    kq, kk, kv = jax.random.split(key, 3)
    bound = 1.0 / (n_embd ** 0.5)
    wq = jax.random.uniform(kq, (n_embd, head_size), dtype, -bound, bound)
    wk = jax.random.uniform(kk, (n_embd, head_size), dtype, -bound, bound)
    wv = jax.random.uniform(kv, (n_embd, head_size), dtype, -bound, bound)
    return wq, wk, wv


if __name__ == "__main__":
    # Small shapes consistent with the module: block_size=8, n_embd=32, head_size=16.
    B, T = 2, 8
    n_embd = 32
    head_size = 16

    key = jax.random.PRNGKey(0)
    kx, kp = jax.random.split(key)
    x = jax.random.normal(kx, (B, T, n_embd), dtype=jnp.float32)
    wq, wk, wv = init_head_params(kp, n_embd, head_size)

    out, attn = head_forward(x, wq, wk, wv, is_decoder=True)
    out = jax.block_until_ready(out)
    attn = jax.block_until_ready(attn)

    # Pure-JAX reference (matches the PyTorch forward).
    q = x @ wq
    k = x @ wk
    v = x @ wv
    scores = (q @ jnp.swapaxes(k, -2, -1)) * (head_size ** -0.5)
    mask = jnp.tril(jnp.ones((T, T), dtype=bool))
    scores = jnp.where(mask[None, :, :], scores, -jnp.inf)
    w_ref = jax.nn.softmax(scores, axis=-1)
    out_ref = w_ref @ v

    assert out.shape == (B, T, head_size)
    assert attn.shape == (B, T, T)
    assert jnp.allclose(attn, w_ref, atol=1e-4, rtol=1e-4)
    assert jnp.allclose(out, out_ref, atol=1e-4, rtol=1e-4)

    print("KERNEL_OK")
</pallas_src>

<mosaic_0001>
module attributes {stable_mosaic.version = 11 : i64} {
  func.func @_head_kernel(%arg0: i32, %arg1: i32, %arg2: memref<1x8x32xf32, #tpu.memory_space<vmem>>, %arg3: memref<1x8x32xf32, #tpu.memory_space<vmem>>, %arg4: memref<32x16xf32, #tpu.memory_space<vmem>>, %arg5: memref<32x16xf32, #tpu.memory_space<vmem>>, %arg6: memref<32x16xf32, #tpu.memory_space<vmem>>, %arg7: memref<1x8x16xf32, #tpu.memory_space<vmem>>, %arg8: memref<1x8x8xf32, #tpu.memory_space<vmem>>) attributes {dimension_semantics = [#tpu.dimension_semantics<parallel>, #tpu.dimension_semantics<parallel>], iteration_bounds = array<i64: 2, 1>, scalar_prefetch = 0 : i64, scratch_operands = 0 : i64, tpu.core_type = #tpu.core_type<tc>, window_params = [{transform_indices = @transform_0, window_bounds = array<i64: 1, 8, 32>}, {transform_indices = @transform_1, window_bounds = array<i64: 1, 8, 32>}, {pipeline_mode = #tpu.pipeline_mode<synchronous>, transform_indices = @transform_2, window_bounds = array<i64: 32, 16>}, {pipeline_mode = #tpu.pipeline_mode<synchronous>, transform_indices = @transform_3, window_bounds = array<i64: 32, 16>}, {pipeline_mode = #tpu.pipeline_mode<synchronous>, transform_indices = @transform_4, window_bounds = array<i64: 32, 16>}, {transform_indices = @transform_5, window_bounds = array<i64: 1, 8, 16>}, {transform_indices = @transform_6, window_bounds = array<i64: 1, 8, 8>}]} {
    %c0 = arith.constant 0 : index
    %c0_0 = arith.constant 0 : index
    %c0_1 = arith.constant 0 : index
    %0 = vector.load %arg2[%c0, %c0_0, %c0_1] : memref<1x8x32xf32, #tpu.memory_space<vmem>>, vector<1x8x32xf32>
    %1 = vector.shape_cast %0 : vector<1x8x32xf32> to vector<8x32xf32>
    %c0_2 = arith.constant 0 : index
    %c0_3 = arith.constant 0 : index
    %c0_4 = arith.constant 0 : index
    %2 = vector.load %arg3[%c0_2, %c0_3, %c0_4] : memref<1x8x32xf32, #tpu.memory_space<vmem>>, vector<1x8x32xf32>
    %3 = vector.shape_cast %2 : vector<1x8x32xf32> to vector<8x32xf32>
    %c0_5 = arith.constant 0 : index
    %c0_6 = arith.constant 0 : index
    %4 = vector.load %arg4[%c0_5, %c0_6] : memref<32x16xf32, #tpu.memory_space<vmem>>, vector<32x16xf32>
    %cst = arith.constant dense<0.000000e+00> : vector<8x16xf32>
    %5 = tpu.matmul %1, %4, %cst {dimension_numbers = #tpu.dot_dimension_numbers<[1], [0], [0], [1], [0, 0, 1, 1], [], []>} : vector<8x32xf32>, vector<32x16xf32>, vector<8x16xf32> -> vector<8x16xf32>
    %c0_7 = arith.constant 0 : index
    %c0_8 = arith.constant 0 : index
    %6 = vector.load %arg5[%c0_7, %c0_8] : memref<32x16xf32, #tpu.memory_space<vmem>>, vector<32x16xf32>
    %cst_9 = arith.constant dense<0.000000e+00> : vector<8x16xf32>
    %7 = tpu.matmul %3, %6, %cst_9 {dimension_numbers = #tpu.dot_dimension_numbers<[1], [0], [0], [1], [0, 0, 1, 1], [], []>} : vector<8x32xf32>, vector<32x16xf32>, vector<8x16xf32> -> vector<8x16xf32>
    %c0_10 = arith.constant 0 : index
    %c0_11 = arith.constant 0 : index
    %8 = vector.load %arg6[%c0_10, %c0_11] : memref<32x16xf32, #tpu.memory_space<vmem>>, vector<32x16xf32>
    %cst_12 = arith.constant dense<0.000000e+00> : vector<8x16xf32>
    %9 = tpu.matmul %3, %8, %cst_12 {dimension_numbers = #tpu.dot_dimension_numbers<[1], [0], [0], [1], [0, 0, 1, 1], [], []>} : vector<8x32xf32>, vector<32x16xf32>, vector<8x16xf32> -> vector<8x16xf32>
    %cst_13 = arith.constant dense<0.000000e+00> : vector<8x8xf32>
    %10 = tpu.matmul %5, %7, %cst_13 {dimension_numbers = #tpu.dot_dimension_numbers<[1], [1], [0], [0], [0, 0, 1, 0], [], []>} : vector<8x16xf32>, vector<8x16xf32>, vector<8x8xf32> -> vector<8x8xf32>
    %cst_14 = arith.constant 2.500000e-01 : f32
    %11 = vector.broadcast %cst_14 : f32 to vector<8x8xf32>
    %12 = arith.mulf %10, %11 : vector<8x8xf32>
    %c8_i32 = arith.constant 8 : i32
    %13 = arith.muli %arg1, %c8_i32 : i32
    %14 = tpu.iota {dimensions = array<i32: 0>} : vector<8x8xi32>
    %15 = vector.broadcast %13 : i32 to vector<8x8xi32>
    %16 = arith.addi %15, %14 : vector<8x8xi32>
    %17 = tpu.iota {dimensions = array<i32: 1>} : vector<8x8xi32>
    %18 = arith.cmpi sle, %17, %16 : vector<8x8xi32>
    %cst_15 = arith.constant 0xFF800000 : f32
    %19 = vector.broadcast %cst_15 : f32 to vector<8x8xf32>
    %20 = arith.select %18, %12, %19 : vector<8x8xi1>, vector<8x8xf32>
    %cst_16 = arith.constant dense<0xFF800000> : vector<8xf32>
    %21 = vector.multi_reduction <maximumf>, %20, %cst_16 [1] : vector<8x8xf32> to vector<8xf32>
    %22 = vector.shape_cast %21 : vector<8xf32> to vector<8x1xf32>
    %23 = vector.broadcast %22 : vector<8x1xf32> to vector<8x8xf32>
    %24 = arith.subf %20, %23 : vector<8x8xf32>
    %25 = math.exp %24 : vector<8x8xf32>
    %cst_17 = arith.constant dense<0.000000e+00> : vector<8xf32>
    %26 = vector.multi_reduction <add>, %25, %cst_17 [1] : vector<8x8xf32> to vector<8xf32>
    %27 = vector.shape_cast %26 : vector<8xf32> to vector<8x1xf32>
    %28 = vector.broadcast %27 : vector<8x1xf32> to vector<8x8xf32>
    %29 = arith.divf %25, %28 : vector<8x8xf32>
    %cst_18 = arith.constant dense<0.000000e+00> : vector<8x16xf32>
    %30 = tpu.matmul %29, %9, %cst_18 {dimension_numbers = #tpu.dot_dimension_numbers<[1], [0], [0], [1], [0, 0, 1, 1], [], []>} : vector<8x8xf32>, vector<8x16xf32>, vector<8x16xf32> -> vector<8x16xf32>
    %c0_19 = arith.constant 0 : index
    %c0_20 = arith.constant 0 : index
    %c0_21 = arith.constant 0 : index
    %31 = vector.load %arg7[%c0_19, %c0_20, %c0_21] : memref<1x8x16xf32, #tpu.memory_space<vmem>>, vector<1x8x16xf32>
    %32 = vector.shape_cast %31 : vector<1x8x16xf32> to vector<8x16xf32>
    %33 = vector.shape_cast %30 : vector<8x16xf32> to vector<1x8x16xf32>
    tpu.vector_store %arg7[%c0_19, %c0_20, %c0_21], %33 {strides = array<i32>} : memref<1x8x16xf32, #tpu.memory_space<vmem>>, vector<1x8x16xf32>,
    %c0_22 = arith.constant 0 : index
    %c0_23 = arith.constant 0 : index
    %c0_24 = arith.constant 0 : index
    %34 = vector.load %arg8[%c0_22, %c0_23, %c0_24] : memref<1x8x8xf32, #tpu.memory_space<vmem>>, vector<1x8x8xf32>
    %35 = vector.shape_cast %34 : vector<1x8x8xf32> to vector<8x8xf32>
    %36 = vector.shape_cast %29 : vector<8x8xf32> to vector<1x8x8xf32>
    tpu.vector_store %arg8[%c0_22, %c0_23, %c0_24], %36 {strides = array<i32>} : memref<1x8x8xf32, #tpu.memory_space<vmem>>, vector<1x8x8xf32>,
    return
  }
  func.func @transform_0(%arg0: i32, %arg1: i32) -> (i32, i32, i32) {
    %c0_i32 = arith.constant 0 : i32
    %c0_i32_0 = arith.constant 0 : i32
    return %arg0, %arg1, %c0_i32 : i32, i32, i32
  }
  func.func @transform_1(%arg0: i32, %arg1: i32) -> (i32, i32, i32) {
    %c0_i32 = arith.constant 0 : i32
    %c0_i32_0 = arith.constant 0 : i32
    %c0_i32_1 = arith.constant 0 : i32
    return %arg0, %c0_i32, %c0_i32_0 : i32, i32, i32
  }
  func.func @transform_2(%arg0: i32, %arg1: i32) -> (i32, i32) {
    %c0_i32 = arith.constant 0 : i32
    %c0_i32_0 = arith.constant 0 : i32
    %c0_i32_1 = arith.constant 0 : i32
    return %c0_i32, %c0_i32_0 : i32, i32
  }
  func.func @transform_3(%arg0: i32, %arg1: i32) -> (i32, i32) {
    %c0_i32 = arith.constant 0 : i32
    %c0_i32_0 = arith.constant 0 : i32
    %c0_i32_1 = arith.constant 0 : i32
    return %c0_i32, %c0_i32_0 : i32, i32
  }
  func.func @transform_4(%arg0: i32, %arg1: i32) -> (i32, i32) {
    %c0_i32 = arith.constant 0 : i32
    %c0_i32_0 = arith.constant 0 : i32
    %c0_i32_1 = arith.constant 0 : i32
    return %c0_i32, %c0_i32_0 : i32, i32
  }
  func.func @transform_5(%arg0: i32, %arg1: i32) -> (i32, i32, i32) {
    %c0_i32 = arith.constant 0 : i32
    %c0_i32_0 = arith.constant 0 : i32
    return %arg0, %arg1, %c0_i32 : i32, i32, i32
  }
  func.func @transform_6(%arg0: i32, %arg1: i32) -> (i32, i32, i32) {
    %c0_i32 = arith.constant 0 : i32
    %c0_i32_0 = arith.constant 0 : i32
    return %arg0, %arg1, %c0_i32 : i32, i32, i32
  }
}

</mosaic_0001>

<llo_original>
// kernel: head_forward.1
$region0: #{head_forward.1}
  #allocation0 [shape = 'u32[]', space=smem, size = 0x4, offset = 0x4, fixed_abs, tag = 'smem constant byte address 0x4 - core index']
  #allocation1 [shape = 'u32[72,128]{1,0:T(1,128)}', space=vmem, size = 0x9000, scoped, tag = 'internal scratch']
  %s0 = inlined_call_operand.vmem [shape: f32[2,8,32], index: 0, kind: input, shape index: {}, may-alias: {0,1}]
  %s1 = inlined_call_operand.vmem [shape: f32[2,8,32], index: 1, kind: input, shape index: {}, may-alias: {0,1}]
  %s2 = inlined_call_operand.vmem [shape: f32[32,16], index: 2, kind: input, shape index: {}]
  %s3 = inlined_call_operand.vmem [shape: f32[32,16], index: 3, kind: input, shape index: {}]
  %s4 = inlined_call_operand.vmem [shape: f32[32,16], index: 4, kind: input, shape index: {}]
  %s5 = inlined_call_operand.hbm [shape: f32[2,8,16], index: 5, kind: output, shape index: {0}]
  %s6 = inlined_call_operand.hbm [shape: f32[2,8,8], index: 6, kind: output, shape index: {1}]
  %7 = xla_tuple %s5, %s6
  %s8 = sld [smem:[#allocation0]]
  $region61: #{head_forward.1} parent=0
    _
  %s10 = ssub.s32 1, %s8
  %s11 = scalar_select 0, %s10, %s8
  $region1: #{head_forward.1} parent=0
    #allocation2 [shape = 'u8[8192]{0}', space=vmem, size = 0x2000, scoped, tag = 'output window, operand 0']
    #allocation3 [shape = 's32[2]{0}', space=sflag, size = 0x8, scoped, tag = 'scoped memory for head_forward.1']
    #allocation4 [shape = 'u8[8192]{0}', space=vmem, size = 0x2000, scoped, tag = 'output window, operand 1']
    #allocation5 [shape = 's32[2]{0}', space=sflag, size = 0x8, scoped, tag = 'scoped memory for head_forward.1']
    %12 = vsyncpa [#allocation3], 0
    %s13 = scalar_lea.sflag [#allocation3], 1
    %14 = vsyncpa %s13, 0
    %15 = vsyncpa [#allocation5], 0
    %s16 = scalar_lea.sflag [#allocation5], 1
    %17 = vsyncpa %s16, 0
    loop: start=0, step=1, limit=4
    $region2: #{head_forward.1} parent=1 // loop_pre_header
      _
    $region3: #{head_forward.1} parent=1 // loop_header
      %s19 = sphi 0, %s23
      %p20 = scmp.ge.s32.totalorder %s19, 4
      %s26 = sphi 0, %s38
      %s27 = sphi 0, %s34
      %s28 = sphi 0, %s26
      %s29 = sphi 0, %s27
      %s30 = sphi 0, %s28
      %s31 = sphi 0, %s29
      %s43 = sphi 0, %s45
      %s46 = sphi 0, %s43
      %s47 = sphi 0, %s46
      %s63 = sphi 0, %s47
      %s69 = sphi 0, %s71
      %s72 = sphi 0, %s69
      %s73 = sphi 0, %s72
      %s89 = sphi 0, %s73
      %s93 = sphi 0, %s93
      %s95 = sphi 0, %s93
      %s96 = sphi 0, %s95
      %s110 = sphi 0, %s96
      %s114 = sphi 0, %s114
      %s116 = sphi 0, %s114
      %s117 = sphi 0, %s116
      %s131 = sphi 0, %s117
      %s135 = sphi 0, %s135
      %s137 = sphi 0, %s135
      %s138 = sphi 0, %s137
      %s152 = sphi 0, %s138
      %s160 = sphi 0, %s162
      %s163 = sphi 0, %s160
      %s164 = sphi 0, %s163
      %s180 = sphi 0, %s164
      %s188 = sphi 0, %s190
      %s191 = sphi 0, %s188
      %s192 = sphi 0, %s191
      %s208 = sphi 0, %s192
    $region4: #{head_forward.1} parent=1 // loop_header_branch
      %22 = sbr.rel (%p20) target = $region8
    $region5: #{head_forward.1} parent=1 // loop_body
      %s24 = ssub.s32 %s19, 1
      %s25 = ssub.s32 %s19, 2
      %s32 = sadd.s32 1, %s27
      %p33 = scmp.ge.s32.totalorder %s32, 1
      %s34 = scalar_select %p33, 0, %s32
      %s35 = sadd.s32 1, %s26
      %s36 = scalar_select %p33, %s35, %s26
      %p37 = scmp.ge.s32.totalorder %s36, 2
      %s38 = scalar_select %p37, 0, %s36
      %s39 = ssub.s32 %s26, %s38
      %s40 = ssub.s32 %s27, %s34
      %s41 = sor.u32 %s39, %s40
      %p42 = scmp.eq.s32.totalorder %s41, 0
      %s44 = sadd.s32 %s43, 1
      %s45 = scalar_select %p42, %s43, %s44
      %p48 = pneg %p42
      %p49 = scmp.eq.s32.totalorder %s19, 1
      %p50 = por %p48, %p49
      %p51 = scmp.ne.s32.totalorder %s43, %s46
      %p52 = scmp.eq.s32.totalorder %s19, 0
      %p53 = por %p51, %p52
      %p54 = scmp.ne.s32.totalorder %s43, %s46
      %p55 = scmp.eq.s32.totalorder %s24, 1
      %p56 = por %p54, %p55
      %p57 = scmp.ne.s32.totalorder %s46, %s47
      %p58 = scmp.eq.s32.totalorder %s24, 0
      %p59 = por %p57, %p58
      %p60 = scmp.ne.s32.totalorder %s46, %s47
      %p61 = scmp.eq.s32.totalorder %s25, 1
      %p62 = por %p60, %p61
      %p64 = scmp.ne.s32.totalorder %s47, %s63
      %p65 = scmp.eq.s32.totalorder %s25, 0
      %p66 = por %p64, %p65
      %s67 = ssub.s32 %s26, %s38
      %p68 = scmp.eq.s32.totalorder %s67, 0
      %s70 = sadd.s32 %s69, 1
      %s71 = scalar_select %p68, %s69, %s70
      %p74 = pneg %p68
      %p75 = scmp.eq.s32.totalorder %s19, 1
      %p76 = por %p74, %p75
      %p77 = scmp.ne.s32.totalorder %s69, %s72
      %p78 = scmp.eq.s32.totalorder %s19, 0
      %p79 = por %p77, %p78
      %p80 = scmp.ne.s32.totalorder %s69, %s72
      %p81 = scmp.eq.s32.totalorder %s24, 1
      %p82 = por %p80, %p81
      %p83 = scmp.ne.s32.totalorder %s72, %s73
      %p84 = scmp.eq.s32.totalorder %s24, 0
      %p85 = por %p83, %p84
      %p86 = scmp.ne.s32.totalorder %s72, %s73
      %p87 = scmp.eq.s32.totalorder %s25, 1
      %p88 = por %p86, %p87
      %p90 = scmp.ne.s32.totalorder %s73, %s89
      %p91 = scmp.eq.s32.totalorder %s25, 0
      %p92 = por %p90, %p91
      %s94 = sadd.s32 %s93, 1
      %p97 = scmp.eq.s32.totalorder %s19, 1
      %p98 = scmp.ne.s32.totalorder %s93, %s95
      %p99 = scmp.eq.s32.totalorder %s19, 0
      %p100 = por %p98, %p99
      %p101 = scmp.ne.s32.totalorder %s93, %s95
      %p102 = scmp.eq.s32.totalorder %s24, 1
      %p103 = por %p101, %p102
      %p104 = scmp.ne.s32.totalorder %s95, %s96
      %p105 = scmp.eq.s32.totalorder %s24, 0
      %p106 = por %p104, %p105
      %p107 = scmp.ne.s32.totalorder %s95, %s96
      %p108 = scmp.eq.s32.totalorder %s25, 1
      %p109 = por %p107, %p108
      %p111 = scmp.ne.s32.totalorder %s96, %s110
      %p112 = scmp.eq.s32.totalorder %s25, 0
      %p113 = por %p111, %p112
      %s115 = sadd.s32 %s114, 1
      %p118 = scmp.eq.s32.totalorder %s19, 1
      %p119 = scmp.ne.s32.totalorder %s114, %s116
      %p120 = scmp.eq.s32.totalorder %s19, 0
      %p121 = por %p119, %p120
      %p122 = scmp.ne.s32.totalorder %s114, %s116
      %p123 = scmp.eq.s32.totalorder %s24, 1
      %p124 = por %p122, %p123
      %p125 = scmp.ne.s32.totalorder %s116, %s117
      %p126 = scmp.eq.s32.totalorder %s24, 0
      %p127 = por %p125, %p126
      %p128 = scmp.ne.s32.totalorder %s116, %s117
      %p129 = scmp.eq.s32.totalorder %s25, 1
      %p130 = por %p128, %p129
      %p132 = scmp.ne.s32.totalorder %s117, %s131
      %p133 = scmp.eq.s32.totalorder %s25, 0
      %p134 = por %p132, %p133
      %s136 = sadd.s32 %s135, 1
      %p139 = scmp.eq.s32.totalorder %s19, 1
      %p140 = scmp.ne.s32.totalorder %s135, %s137
      %p141 = scmp.eq.s32.totalorder %s19, 0
      %p142 = por %p140, %p141
      %p143 = scmp.ne.s32.totalorder %s135, %s137
      %p144 = scmp.eq.s32.totalorder %s24, 1
      %p145 = por %p143, %p144
      %p146 = scmp.ne.s32.totalorder %s137, %s138
      %p147 = scmp.eq.s32.totalorder %s24, 0
      %p148 = por %p146, %p147
      %p149 = scmp.ne.s32.totalorder %s137, %s138
      %p150 = scmp.eq.s32.totalorder %s25, 1
      %p151 = por %p149, %p150
      %p153 = scmp.ne.s32.totalorder %s138, %s152
      %p154 = scmp.eq.s32.totalorder %s25, 0
      %p155 = por %p153, %p154
      %s156 = ssub.s32 %s26, %s38
      %s157 = ssub.s32 %s27, %s34
      %s158 = sor.u32 %s156, %s157
      %p159 = scmp.eq.s32.totalorder %s158, 0
      %s161 = sadd.s32 %s160, 1
      %s162 = scalar_select %p159, %s160, %s161
      %p165 = pneg %p159
      %p166 = scmp.eq.s32.totalorder %s19, 1
      %p167 = por %p165, %p166
      %p168 = scmp.ne.s32.totalorder %s160, %s163
      %p169 = scmp.eq.s32.totalorder %s19, 0
      %p170 = por %p168, %p169
      %p171 = scmp.ne.s32.totalorder %s160, %s163
      %p172 = scmp.eq.s32.totalorder %s24, 1
      %p173 = por %p171, %p172
      %p174 = scmp.ne.s32.totalorder %s163, %s164
      %p175 = scmp.eq.s32.totalorder %s24, 0
      %p176 = por %p174, %p175
      %p177 = scmp.ne.s32.totalorder %s163, %s164
      %p178 = scmp.eq.s32.totalorder %s25, 1
      %p179 = por %p177, %p178
      %p181 = scmp.ne.s32.totalorder %s164, %s180
      %p182 = scmp.eq.s32.totalorder %s25, 0
      %p183 = por %p181, %p182
      %s184 = ssub.s32 %s26, %s38
      %s185 = ssub.s32 %s27, %s34
      %s186 = sor.u32 %s184, %s185
      %p187 = scmp.eq.s32.totalorder %s186, 0
      %s189 = sadd.s32 %s188, 1
      %s190 = scalar_select %p187, %s188, %s189
      %p193 = pneg %p187
      %p194 = scmp.eq.s32.totalorder %s19, 1
      %p195 = por %p193, %p194
      %p196 = scmp.ne.s32.totalorder %s188, %s191
      %p197 = scmp.eq.s32.totalorder %s19, 0
      %p198 = por %p196, %p197
      %p199 = scmp.ne.s32.totalorder %s188, %s191
      %p200 = scmp.eq.s32.totalorder %s24, 1
      %p201 = por %p199, %p200
      %p202 = scmp.ne.s32.totalorder %s191, %s192
      %p203 = scmp.eq.s32.totalorder %s24, 0
      %p204 = por %p202, %p203
      %p205 = scmp.ne.s32.totalorder %s191, %s192
      %p206 = scmp.eq.s32.totalorder %s25, 1
      %p207 = por %p205, %p206
      %p209 = scmp.ne.s32.totalorder %s192, %s208
      %p210 = scmp.eq.s32.totalorder %s25, 0
      %p211 = por %p209, %p210
      %p212 = scmp.le.s32.totalorder 1, %s19
      %p213 = scmp.lt.s32.totalorder %s19, 3
      %p214 = pnand %p212, %p213
      %p215 = pneg %p214
      // Predicated region
      $region9: #{head_forward.1} parent=5 // pred_check
        _
      $region10: #{head_forward.1} parent=5 // pred_check_branch
        %217 = sbr.rel (%p214) target = $region12
      $region11: #{head_forward.1} parent=5 // pred_region
        %s218 = ssub.s32 %s19, 1
        // Predicated region
        $region13: #{head_forward.1} parent=11 // pred_check
          %p219 = pneg %p106
        $region14: #{head_forward.1} parent=11 // pred_check_branch
          %221 = sbr.rel (%p219) target = $region16
        $region15: #{head_forward.1} parent=11 // pred_region
          _
        $region16: #{head_forward.1} parent=11 // pred_fallthru
          _
        // Predicated region
        $region17: #{head_forward.1} parent=11 // pred_check
          %p222 = pneg %p127
        $region18: #{head_forward.1} parent=11 // pred_check_branch
          %224 = sbr.rel (%p222) target = $region20
        $region19: #{head_forward.1} parent=11 // pred_region
          _
        $region20: #{head_forward.1} parent=11 // pred_fallthru
          _
        // Predicated region
        $region21: #{head_forward.1} parent=11 // pred_check
          %p225 = pneg %p148
        $region22: #{head_forward.1} parent=11 // pred_check_branch
          %227 = sbr.rel (%p225) target = $region24
        $region23: #{head_forward.1} parent=11 // pred_region
          _
        $region24: #{head_forward.1} parent=11 // pred_fallthru
          _
      $region12: #{head_forward.1} parent=5 // pred_fallthru
        _
      %p228 = scmp.lt.s32.totalorder %s19, 2
      // Predicated region
      $region25: #{head_forward.1} parent=5 // pred_check
        %p229 = pneg %p228
      $region26: #{head_forward.1} parent=5 // pred_check_branch
        %231 = sbr.rel (%p229) target = $region28
      $region27: #{head_forward.1} parent=5 // pred_region
        // Predicated region
        $region29: #{head_forward.1} parent=27 // pred_check
          %p232 = pneg %p53
        $region30: #{head_forward.1} parent=27 // pred_check_branch
          %234 = sbr.rel (%p232) target = $region32
        $region31: #{head_forward.1} parent=27 // pred_region
          %p235 = scmp.lt.s32.totalorder %s26, 1
          %s236 = scalar_select %p235, %s26, 1
          %p237 = scmp.lt.s32.totalorder %s27, 0
          %s238 = scalar_select %p237, %s27, 0
          %s239 = sadd.s32 %s238, %s236
          %s240 = smul.addr %s239, 8
          %s241 = scalar_lea.vmem %s0, %s240
        $region32: #{head_forward.1} parent=27 // pred_fallthru
          _
        // Predicated region
        $region33: #{head_forward.1} parent=27 // pred_check
          %p242 = pneg %p79
        $region34: #{head_forward.1} parent=27 // pred_check_branch
          %244 = sbr.rel (%p242) target = $region36
        $region35: #{head_forward.1} parent=27 // pred_region
          %p245 = scmp.lt.s32.totalorder %s26, 1
          %s246 = scalar_select %p245, %s26, 1
          %s247 = smul.addr %s246, 8
          %s248 = scalar_lea.vmem %s1, %s247
        $region36: #{head_forward.1} parent=27 // pred_fallthru
          _
      $region28: #{head_forward.1} parent=5 // pred_fallthru
        _
      %p249 = scmp.le.s32.totalorder 1, %s19
      %p250 = scmp.lt.s32.totalorder %s19, 3
      %p251 = pnand %p249, %p250
      %p252 = pneg %p251
      // Predicated region
      $region37: #{head_forward.1} parent=5 // pred_check
        _
      $region38: #{head_forward.1} parent=5 // pred_check_branch
        %254 = sbr.rel (%p251) target = $region40
      $region39: #{head_forward.1} parent=5 // pred_region
        %s255 = ssub.s32 %s19, 1
        %p256 = scmp.lt.s32.totalorder %s28, 1
        %s257 = scalar_select %p256, %s28, 1
        %p258 = scmp.lt.s32.totalorder %s29, 0
        %s259 = scalar_select %p258, %s29, 0
        %s260 = sadd.s32 %s259, %s257
        %s261 = smul.addr %s260, 8
        %s262 = scalar_lea.vmem %s0, %s261
        %p263 = pneg %p59
        %p264 = pneg %p56
        %p265 = scmp.lt.s32.totalorder %s28, 1
        %s266 = scalar_select %p265, %s28, 1
        %s267 = smul.addr %s266, 8
        %s268 = scalar_lea.vmem %s1, %s267
        %p269 = pneg %p85
        %p270 = pneg %p82
        %p271 = pneg %p106
        %p272 = pneg %p103
        %p273 = pneg %p127
        %p274 = pneg %p124
        %p275 = pneg %p148
        %p276 = pneg %p145
        %p277 = pneg %p176
        %p278 = pneg %p173
        %s279 = sand.u32 %s163, 1
        %s280 = scalar_lea.sflag [#allocation3], %s279
        %s281 = sand.u32 %s163, 1
        %s282 = smul.addr %s281, 8
        %s283 = scalar_lea.vmem [#allocation2], %s282
        %p284 = pneg %p204
        %p285 = pneg %p201
        %s286 = sand.u32 %s191, 1
        %s287 = scalar_lea.sflag [#allocation5], %s286
        %s288 = sand.u32 %s191, 1
        %s289 = smul.addr %s288, 8
        %s290 = scalar_lea.vmem [#allocation4], %s289
        %p291 = scmp.lt.s32.totalorder %s28, 1
        %s292 = scalar_select %p291, %s28, 1
        %p293 = scmp.lt.s32.totalorder %s29, 0
        %s294 = scalar_select %p293, %s29, 0
        %s295 = sadd.s32 %s294, %s292
        %s296 = smul.addr %s295, 8
        %s297 = scalar_lea.vmem %s0, %s296
        %p298 = scmp.lt.s32.totalorder %s28, 1
        %s299 = scalar_select %p298, %s28, 1
        %s300 = smul.addr %s299, 8
        %s301 = scalar_lea.vmem %s1, %s300
        %v302 = vld [vmem:[%s297] sm:$0xff]
        %v303 = vld [vmem:[%s301] sm:$0xff]
        %v304 = vld [vmem:[%s2] sm:$0xff]
        %v305 = vld [vmem:[%s2 + $0x8] sm:$0xff]
        %v306 = vld [vmem:[%s2 + $0x10] sm:$0xff]
        %v307 = vld [vmem:[%s2 + $0x18] sm:$0xff]
        %vm308 = vcmask 261120
        %v310 = vsel %vm308, %v302, 0
        %312 = vmatpush.msra.mxu0 0.0
        %313 = vmatpush.msra.mxu0 0.0
        %314 = vmatpush.msra.mxu0 0.0
        %315 = vmatpush.msra.mxu0 0.0
        %316 = vmatpush.msra.mxu0 0.0
        %317 = vmatpush.msra.mxu0 0.0
        %318 = vmatpush.msra.mxu0 0.0
        %319 = vmatpush.msra.mxu0 0.0
        %320 = vmatpush.msra.mxu0 0.0
        %321 = vmatpush.msra.mxu0 0.0
        %322 = vmatpush.msra.mxu0 0.0
        %323 = vmatpush.msra.mxu0 0.0
        %324 = vmatpush.msra.mxu0 %v307
        %325 = vmatpush.msra.mxu0 %v306
        %326 = vmatpush.msra.mxu0 %v305
        %327 = vmatpush.msra.mxu0 %v304
        %328 = vmatmul.f32.gmra.mxu0 %v310
        %v329 = vpop.f32.mrf.mxu0
        %v330 = vadd.f32 0.0, %v329
        %331 = vdwg.mxu0
        %v332 = vld [vmem:[%s3] sm:$0xff]
        %v333 = vld [vmem:[%s3 + $0x8] sm:$0xff]
        %v334 = vld [vmem:[%s3 + $0x10] sm:$0xff]
        %v335 = vld [vmem:[%s3 + $0x18] sm:$0xff]
        %v337 = vsel %vm308, %v303, 0
        %339 = vmatpush.msra.mxu0 0.0
        %340 = vmatpush.msra.mxu0 0.0
        %341 = vmatpush.msra.mxu0 0.0
        %342 = vmatpush.msra.mxu0 0.0
        %343 = vmatpush.msra.mxu0 0.0
        %344 = vmatpush.msra.mxu0 0.0
        %345 = vmatpush.msra.mxu0 0.0
        %346 = vmatpush.msra.mxu0 0.0
        %347 = vmatpush.msra.mxu0 0.0
        %348 = vmatpush.msra.mxu0 0.0
        %349 = vmatpush.msra.mxu0 0.0
        %350 = vmatpush.msra.mxu0 0.0
        %351 = vmatpush.msra.mxu0 %v335
        %352 = vmatpush.msra.mxu0 %v334
        %353 = vmatpush.msra.mxu0 %v333
        %354 = vmatpush.msra.mxu0 %v332
        %355 = vmatmul.f32.gmra.mxu0 %v337
        %v356 = vpop.f32.mrf.mxu0
        %v357 = vadd.f32 0.0, %v356
        %358 = vdwg.mxu0
        %v359 = vld [vmem:[%s4] sm:$0xff]
        %v360 = vld [vmem:[%s4 + $0x8] sm:$0xff]
        %v361 = vld [vmem:[%s4 + $0x10] sm:$0xff]
        %v362 = vld [vmem:[%s4 + $0x18] sm:$0xff]
        %363 = vmatpush.msra.mxu0 0.0
        %364 = vmatpush.msra.mxu0 0.0
        %365 = vmatpush.msra.mxu0 0.0
        %366 = vmatpush.msra.mxu0 0.0
        %367 = vmatpush.msra.mxu0 0.0
        %368 = vmatpush.msra.mxu0 0.0
        %369 = vmatpush.msra.mxu0 0.0
        %370 = vmatpush.msra.mxu0 0.0
        %371 = vmatpush.msra.mxu0 0.0
        %372 = vmatpush.msra.mxu0 0.0
        %373 = vmatpush.msra.mxu0 0.0
        %374 = vmatpush.msra.mxu0 0.0
        %375 = vmatpush.msra.mxu0 %v362
        %376 = vmatpush.msra.mxu0 %v361
        %377 = vmatpush.msra.mxu0 %v360
        %378 = vmatpush.msra.mxu0 %v359
        %379 = vmatmul.f32.gmra.mxu0 %v337
        %v380 = vpop.f32.mrf.mxu0
        %v381 = vadd.f32 0.0, %v380
        %382 = vdwg.mxu0
        %vm383 = vcmask 130048
        %v385 = vsel %vm383, %v330, 0
        %v388 = vsel %vm383, %v357, 0
        %390 = vmatpush.xpose.msra.mxu0 0.0
        %391 = vmatpush.xpose.msra.mxu0 0.0
        %392 = vmatpush.xpose.msra.mxu0 0.0
        %393 = vmatpush.xpose.msra.mxu0 0.0
        %394 = vmatpush.xpose.msra.mxu0 0.0
        %395 = vmatpush.xpose.msra.mxu0 0.0
        %396 = vmatpush.xpose.msra.mxu0 0.0
        %397 = vmatpush.xpose.msra.mxu0 0.0
        %398 = vmatpush.xpose.msra.mxu0 0.0
        %399 = vmatpush.xpose.msra.mxu0 0.0
        %400 = vmatpush.xpose.msra.mxu0 0.0
        %401 = vmatpush.xpose.msra.mxu0 0.0
        %402 = vmatpush.xpose.msra.mxu0 0.0
        %403 = vmatpush.xpose.msra.mxu0 0.0
        %404 = vmatpush.xpose.msra.mxu0 0.0
        %405 = vmatpush.xpose.msra.mxu0 %v388
        %406 = vmatmul.f32.gmra.mxu0 %v385
        %v407 = vpop.f32.mrf.mxu0
        %v408 = vadd.f32 0.0, %v407
        %409 = vdwg.mxu0
        %v410 = vmul.f32 %v408, 0.25
        %s411 = smul.u32 %s29, 8
        %v412 = vlaneseq
        %v413 = vshrl.u32 %v412, 7
        %v414 = vstv %s411
        %v415 = vadd.s32 %v414, %v413
        %v416 = vlaneseq
        %v417 = vand.u32 %v416, 127
        %vm418 = vcmp.le.s32.totalorder %v417, %v415
        %v419 = vsel %vm418, %v410, -inf
        %vm420 = vcmask 64512
        %v421 = vsel %vm420, %v419, -inf
        %422 = vmax.xlane.f32.xlu0 %v421
        %v423 = vpop.xlane.xlu0 %422
        %v424 = vsub.f32 %v419, %v423
        %v425 = vmul.f32 %v424, 1.442695
        %v426 = vpow.pop %v425
        %v427 = vsel %vm420, %v426, 0.0
        %428 = vadd.xlane.f32.xlu0 %v427
        %v429 = vpop.xlane.xlu0 %428
        %v430 = vrcp.pop %v429
        %v431 = vmul.f32 %v429, %v430
        %v432 = vsub.f32 1.0, %v431
        %v433 = vmul.f32 %v430, %v432
        %v434 = vadd.f32 %v430, %v433
        %vm435 = vweird.f32 %v429
        %vm436 = vweird.f32 %v430
        %vm437 = vmor %vm435, %vm436
        %v438 = vsel %vm437, %v430, %v434
        %v439 = vand.u32 2147483647, %v429
        %vm440 = vcmp.eq.f32.partialorder %v439, 8.507059e+37
        %v441 = vand.u32 %v429, 2147483648
        %v442 = vor.u32 1.1754944e-38, %v441
        %v443 = vsel %vm440, %v442, %v438
        %v444 = vmul.f32 %v426, %v443
        %v446 = vsel %vm420, %v444, 0
        %448 = vmatpush.msra.mxu0 0.0
        %449 = vmatpush.msra.mxu0 0.0
        %450 = vmatpush.msra.mxu0 0.0
        %451 = vmatpush.msra.mxu0 0.0
        %452 = vmatpush.msra.mxu0 0.0
        %453 = vmatpush.msra.mxu0 0.0
        %454 = vmatpush.msra.mxu0 0.0
        %455 = vmatpush.msra.mxu0 0.0
        %456 = vmatpush.msra.mxu0 0.0
        %457 = vmatpush.msra.mxu0 0.0
        %458 = vmatpush.msra.mxu0 0.0
        %459 = vmatpush.msra.mxu0 0.0
        %460 = vmatpush.msra.mxu0 0.0
        %461 = vmatpush.msra.mxu0 0.0
        %462 = vmatpush.msra.mxu0 0.0
        %463 = vmatpush.msra.mxu0 %v381
        %464 = vmatmul.f32.gmra.mxu0 %v446
        %v465 = vpop.f32.mrf.mxu0
        %v466 = vadd.f32 0.0, %v465
        %467 = vdwg.mxu0
        %468 = vst.msk [vmem:[%s283] sm:$0xff] %vm383, %v466
        %469 = vst.msk [vmem:[%s290] sm:$0xff] %vm420, %v444
        %s470 = sand.u32 %s163, 1
        %s471 = scalar_lea.sflag [#allocation3], %s470
        %s472 = sand.u32 %s163, 1
        %s473 = smul.addr %s472, 8
        %s474 = scalar_lea.vmem [#allocation2], %s473
        %s475 = sand.u32 %s191, 1
        %s476 = scalar_lea.sflag [#allocation5], %s475
        %s477 = sand.u32 %s191, 1
        %s478 = smul.addr %s477, 8
        %s479 = scalar_lea.vmem [#allocation4], %s478
        // Predicated region
        $region41: #{head_forward.1} parent=39 // pred_check
          %p480 = pneg %p173
        $region42: #{head_forward.1} parent=39 // pred_check_branch
          %482 = sbr.rel (%p480) target = $region44
        $region43: #{head_forward.1} parent=39 // pred_region
          %484 = vsyncadd %s471, 0
          %s485 = sadd.s32 %s29, %s28
          %s486 = smul.addr %s485, 8
          %s487 = scalar_lea.hbm %s5, %s486
          %s489 = sshll.u32 %s474, 4
          %s490 = int_to_ptr.vmem [resolvable:$true] %s489
          %s491 = sshll.u32 %s487, 4
          %s492 = int_to_ptr.hbm [resolvable:$true] %s491
          %494 = dma.vmem_to_hbm [thread:$0]  %s490, 128, %s492, %s471
        $region44: #{head_forward.1} parent=39 // pred_fallthru
          _
        // Predicated region
        $region45: #{head_forward.1} parent=39 // pred_check
          %p495 = pneg %p201
        $region46: #{head_forward.1} parent=39 // pred_check_branch
          %497 = sbr.rel (%p495) target = $region48
        $region47: #{head_forward.1} parent=39 // pred_region
          %499 = vsyncadd %s476, 0
          %s500 = sadd.s32 %s29, %s28
          %s501 = smul.addr %s500, 8
          %s502 = scalar_lea.hbm %s6, %s501
          %s504 = sshll.u32 %s479, 4
          %s505 = int_to_ptr.vmem [resolvable:$true] %s504
          %s506 = sshll.u32 %s502, 4
          %s507 = int_to_ptr.hbm [resolvable:$true] %s506
          %509 = dma.vmem_to_hbm [thread:$0]  %s505, 128, %s507, %s476
        $region48: #{head_forward.1} parent=39 // pred_fallthru
          _
      $region40: #{head_forward.1} parent=5 // pred_fallthru
        _
      %p510 = scmp.le.s32.totalorder 2, %s19
      // Predicated region
      $region49: #{head_forward.1} parent=5 // pred_check
        %p511 = pneg %p510
      $region50: #{head_forward.1} parent=5 // pred_check_branch
        %513 = sbr.rel (%p511) target = $region52
      $region51: #{head_forward.1} parent=5 // pred_region
        %s514 = ssub.s32 %s19, 2
        // Predicated region
        $region53: #{head_forward.1} parent=51 // pred_check
          %p515 = pneg %p179
        $region54: #{head_forward.1} parent=51 // pred_check_branch
          %517 = sbr.rel (%p515) target = $region56
        $region55: #{head_forward.1} parent=51 // pred_region
          %s518 = sand.u32 %s164, 1
          %s519 = scalar_lea.sflag [#allocation3], %s518
          %s520 = sand.u32 %s164, 1
          %s521 = smul.addr %s520, 8
          %s522 = scalar_lea.vmem [#allocation2], %s521
          %524 = dma.done %s519, 128
        $region56: #{head_forward.1} parent=51 // pred_fallthru
          _
        // Predicated region
        $region57: #{head_forward.1} parent=51 // pred_check
          %p525 = pneg %p207
        $region58: #{head_forward.1} parent=51 // pred_check_branch
          %527 = sbr.rel (%p525) target = $region60
        $region59: #{head_forward.1} parent=51 // pred_region
          %s528 = sand.u32 %s192, 1
          %s529 = scalar_lea.sflag [#allocation5], %s528
          %s530 = sand.u32 %s192, 1
          %s531 = smul.addr %s530, 8
          %s532 = scalar_lea.vmem [#allocation4], %s531
          %534 = dma.done %s529, 128
        $region60: #{head_forward.1} parent=51 // pred_fallthru
          _
      $region52: #{head_forward.1} parent=5 // pred_fallthru
        _
    $region6: #{head_forward.1} parent=1 // loop_footer
      %s23 = sadd.s32 1, %s19
    $region7: #{head_forward.1} parent=1 // loop_footer_branch
      %18 = sbr.rel target = $region3
    $region8: #{head_forward.1} parent=1 // loop_exit
      _
    %535 = vsyncpa [#allocation3], 1
    %s536 = scalar_lea.sflag [#allocation3], 1
    %537 = vsyncpa %s536, 1
    %538 = vsyncpa [#allocation5], 1
    %s539 = scalar_lea.sflag [#allocation5], 1
    %540 = vsyncpa %s539, 1

</llo_original>
